<compile_context>
chip_gen: v7x
topology: tpu7x:2x2x1
jax: 0.10.0
libtpu: 0.0.40
codegen_flags: <defaults>
</compile_context>

<pallas_src>
import math

import jax
import jax.numpy as jnp
from jax.experimental import pallas as pl
from jax.experimental.pallas import tpu as pltpu

HIDDEN = 32         # nn.Linear(input_dim, 32) inside SelectiveHead.generator
HIDDEN_P = 128      # zero-padded hidden width: full lane tile
LANE = 128


def _round_up(x, m):
    return (x + m - 1) // m * m


# ---------------------------------------------------------------------------
# Pallas kernel: all SelectiveHeads, gen*importance*gate, head-reduced.
# ---------------------------------------------------------------------------
def _fused_heads_kernel(x_ref, w1_ref, b1_ref, wa_ref, ba_ref, w2_ref, b2_ref,
                        gate_ref, out_ref):
    head = pl.program_id(2)

    @pl.when(head == 0)
    def _():
        out_ref[...] = jnp.zeros_like(out_ref)

    x = x_ref[...]                                            # (tile_rows, d_in_p) bf16

    # Generator hidden layer (recomputed per out-tile; cheap, kernel is HBM-bound).
    hid = jnp.dot(x, w1_ref[0], preferred_element_type=jnp.float32) + b1_ref[0]
    hid = jnp.maximum(hid, 0.0)                               # f32 ReLU (VPU)

    # Attention / importance branch for this out-tile (EUP sigmoid, f32).
    att = jax.nn.sigmoid(
        jnp.dot(x, wa_ref[0], preferred_element_type=jnp.float32) + ba_ref[0])

    # Generator output for this out-tile.
    gen = jnp.dot(hid.astype(w2_ref.dtype), w2_ref[0],
                  preferred_element_type=jnp.float32) + b2_ref[0]

    # Gate-weighted head reduction straight into the resident output block.
    out_ref[...] += gen * att * gate_ref[0]


# ---------------------------------------------------------------------------
# Tiling / VMEM budgeting (generation-aware).
# ---------------------------------------------------------------------------
def _vmem_need_bytes(tile_rows, tile_out, d_in_p, x_itemsize):
    per_step = (tile_rows * d_in_p * x_itemsize                     # x
                + d_in_p * HIDDEN_P * x_itemsize + HIDDEN_P * 4     # w1, b1
                + d_in_p * tile_out * x_itemsize + tile_out * 4     # wa, ba
                + HIDDEN_P * tile_out * x_itemsize + tile_out * 4   # w2, b2
                + tile_rows * 4                                     # gate
                + tile_rows * tile_out * 4)                         # out block (f32)
    return 2 * per_step                                             # double-buffered


def _vmem_capacity_bytes():
    try:
        return int(pltpu.get_tpu_info().vmem_capacity_bytes)
    except Exception:
        return 64 << 20                 # v7x has the smallest per-TC VMEM


def _pick_tile_out(out_p, cap=512):
    n = out_p // LANE
    best = 1
    for d in range(1, min(n, cap // LANE) + 1):
        if n % d == 0:
            best = d
    return best * LANE


def _pick_tile_rows(rows, d_in_p, tile_out, x_itemsize, budget):
    rows8 = _round_up(rows, 8)
    if rows8 <= 256:
        t = rows8
    else:
        t = 256
        for cand in (1024, 768, 512, 256):    # multiples of the 256-deep MXU M dim
            if _vmem_need_bytes(cand, tile_out, d_in_p, x_itemsize) <= budget:
                t = cand
                break
    while t > 8 and _vmem_need_bytes(t, tile_out, d_in_p, x_itemsize) > budget:
        t -= 8
    return max(t, 8)


# ---------------------------------------------------------------------------
# Parameter packing.
# ---------------------------------------------------------------------------
def pack_head_params(heads, input_dim, output_dim, compute_dtype=jnp.bfloat16):
    """Pack per-head SelectiveHead params ((in,out) layout) into padded stacks."""
    num_heads = len(heads)
    d_in_p = _round_up(input_dim, LANE)
    out_p = _round_up(output_dim, LANE)

    w1 = jnp.zeros((num_heads, d_in_p, HIDDEN_P), jnp.float32)
    b1 = jnp.zeros((num_heads, 1, HIDDEN_P), jnp.float32)
    wa = jnp.zeros((num_heads, d_in_p, out_p), jnp.float32)
    ba = jnp.zeros((num_heads, 1, out_p), jnp.float32)
    w2 = jnp.zeros((num_heads, HIDDEN_P, out_p), jnp.float32)
    b2 = jnp.zeros((num_heads, 1, out_p), jnp.float32)
    for h, p in enumerate(heads):
        w1 = w1.at[h, :input_dim, :HIDDEN].set(p["w1"])
        b1 = b1.at[h, :, :HIDDEN].set(p["b1"])
        wa = wa.at[h, :input_dim, :output_dim].set(p["wa"])
        ba = ba.at[h, :, :output_dim].set(p["ba"])
        w2 = w2.at[h, :HIDDEN, :output_dim].set(p["w2"])
        b2 = b2.at[h, :, :output_dim].set(p["b2"])

    return dict(
        w1=w1.astype(compute_dtype), b1=b1,     # MXU operands bf16, biases f32
        wa=wa.astype(compute_dtype), ba=ba,
        w2=w2.astype(compute_dtype), b2=b2,
        input_dim=input_dim, output_dim=output_dim,
        d_in_p=d_in_p, out_p=out_p, num_heads=num_heads,
        compute_dtype=compute_dtype,
    )


# ---------------------------------------------------------------------------
# Kernel wrapper.
# ---------------------------------------------------------------------------
def selective_heads_combined(x, gate_rows, packed, *, tile_rows=None, tile_out=None):
    """out[r, :] = sum_h gen_h(x_r) * importance_h(x_r) * gate_rows[h, r].

    x: (rows, input_dim) f32, or already lane-padded (rows, d_in_p) bf16.
    gate_rows: (num_heads, rows) per-row head weights.
    Returns (rows, output_dim) f32.
    """
    rows, din = x.shape
    num_heads = packed["num_heads"]
    d_in_p, out_p = packed["d_in_p"], packed["out_p"]
    out_dim = packed["output_dim"]
    cdt = packed["compute_dtype"]
    isz = jnp.dtype(cdt).itemsize
    assert din in (packed["input_dim"], d_in_p)
    assert gate_rows.shape == (num_heads, rows)

    cap = _vmem_capacity_bytes()
    budget = max(8 << 20, min(cap // 2, 48 << 20))
    if tile_out is None:
        tile_out = _pick_tile_out(out_p)
    if tile_rows is None:
        tile_rows = _pick_tile_rows(rows, d_in_p, tile_out, isz, budget)
    rows_p = _round_up(rows, tile_rows)

    # Lane-dense bf16 input slab; skip the extra pass when the caller already
    # built it padded (dynamic_selective_hypernet_forward does).
    if din == d_in_p and x.dtype == cdt and rows_p == rows:
        xp = x
    else:
        xp = jnp.zeros((rows_p, d_in_p), cdt).at[:rows, :din].set(x.astype(cdt))

    gp = jnp.zeros((num_heads, rows_p, 1), jnp.float32)
    gp = gp.at[:, :rows, 0].set(gate_rows.astype(jnp.float32))

    n_row_tiles = rows_p // tile_rows
    n_out_tiles = out_p // tile_out
    grid = (n_row_tiles, n_out_tiles, num_heads)

    # Cost hint reflecting the new DMA pattern: x once per row tile, weights
    # once per (row tile, out tile, head), head-reduced f32 output written once.
    flops = 2 * rows_p * num_heads * (
        n_out_tiles * d_in_p * HIDDEN_P + (d_in_p + HIDDEN_P) * out_p)
    w_bytes = num_heads * (n_out_tiles * (d_in_p * HIDDEN_P * isz + HIDDEN_P * 4)
                           + (d_in_p + HIDDEN_P) * out_p * isz + 2 * out_p * 4)
    bytes_accessed = (rows_p * d_in_p * isz
                      + n_row_tiles * w_bytes
                      + n_row_tiles * n_out_tiles * num_heads * tile_rows * 4
                      + rows_p * out_p * 4)
    cost = pl.CostEstimate(flops=int(flops),
                           transcendentals=int(rows_p * num_heads * out_p),
                           bytes_accessed=int(bytes_accessed))

    vmem_need = _vmem_need_bytes(tile_rows, tile_out, d_in_p, isz)
    vmem_limit = int(min(cap - (4 << 20), max(32 << 20, vmem_need + (16 << 20))))

    out = pl.pallas_call(
        _fused_heads_kernel,
        out_shape=jax.ShapeDtypeStruct((rows_p, out_p), jnp.float32),
        grid_spec=pltpu.PrefetchScalarGridSpec(
            num_scalar_prefetch=0,
            grid=grid,
            in_specs=[
                pl.BlockSpec((tile_rows, d_in_p), lambda i, j, h: (i, 0)),
                pl.BlockSpec((1, d_in_p, HIDDEN_P), lambda i, j, h: (h, 0, 0)),
                pl.BlockSpec((1, 1, HIDDEN_P), lambda i, j, h: (h, 0, 0)),
                pl.BlockSpec((1, d_in_p, tile_out), lambda i, j, h: (h, 0, j)),
                pl.BlockSpec((1, 1, tile_out), lambda i, j, h: (h, 0, j)),
                pl.BlockSpec((1, HIDDEN_P, tile_out), lambda i, j, h: (h, 0, j)),
                pl.BlockSpec((1, 1, tile_out), lambda i, j, h: (h, 0, j)),
                pl.BlockSpec((1, tile_rows, 1), lambda i, j, h: (h, i, 0)),
            ],
            out_specs=pl.BlockSpec((tile_rows, tile_out), lambda i, j, h: (i, j)),
        ),
        compiler_params=pltpu.CompilerParams(
            dimension_semantics=("parallel", "parallel", "arbitrary"),
            vmem_limit_bytes=vmem_limit),
        cost_estimate=cost,
    )(xp, packed["w1"], packed["b1"], packed["wa"], packed["ba"],
      packed["w2"], packed["b2"], gp)

    return out[:rows, :out_dim]


# ---------------------------------------------------------------------------
# Pure-JAX references (same bf16 quantization of MXU operands as the kernel).
# ---------------------------------------------------------------------------
def reference_heads(x, heads, compute_dtype=jnp.bfloat16):
    q = lambda a: a.astype(compute_dtype).astype(jnp.float32)
    hi = jax.lax.Precision.HIGHEST
    xs = q(x)
    gens, imps = [], []
    for p in heads:
        h = jnp.maximum(jnp.dot(xs, q(p["w1"]), precision=hi) + p["b1"], 0.0)
        gens.append(jnp.dot(q(h), q(p["w2"]), precision=hi) + p["b2"])
        imps.append(jax.nn.sigmoid(jnp.dot(xs, q(p["wa"]), precision=hi) + p["ba"]))
    return jnp.stack(gens), jnp.stack(imps)


def reference_combined(x, heads, gate_rows, compute_dtype=jnp.bfloat16):
    gen, imp = reference_heads(x, heads, compute_dtype)        # (H, rows, T)
    return (gen * imp * gate_rows[:, :, None]).sum(axis=0)


def reference_forward(x, params, compute_dtype=jnp.bfloat16):
    batch = x.shape[0]
    xf = x.reshape(batch, -1)
    (w1, b1), (w2, b2) = params["fe1"], params["fe2"]
    features = jnp.maximum(xf @ w1 + b1, 0.0) @ w2 + b2
    embeds = params["embeds"]
    num_slots = embeds.shape[0]
    head_inputs = jnp.concatenate(
        [jnp.broadcast_to(features[None], (num_slots, batch, features.shape[1])),
         jnp.broadcast_to(embeds[:, None, :], (num_slots, batch, embeds.shape[1]))],
        axis=-1).reshape(num_slots * batch, -1)
    gen, imp = reference_heads(head_inputs, params["heads"], compute_dtype)
    num_heads, total = gen.shape[0], gen.shape[-1]
    all_w = gen.reshape(num_heads, num_slots, batch, total)
    all_i = imp.reshape(num_heads, num_slots, batch, total)
    wg, bg = params["gate"]
    head_importance = jax.nn.softmax(features @ wg + bg, axis=1)   # (B, H)
    final = []
    for p in range(num_slots):
        pw, pi = all_w[:, p], all_i[:, p]                          # (H, B, T)
        # Literal reproduction of the reference broadcast quirk (needs B == H).
        final.append((pw * pi * head_importance[:, :, None]).sum(axis=0))
    return jnp.concatenate(final, axis=1)


# ---------------------------------------------------------------------------
# DynamicSelectiveHyperNet forward (plumbing in plain JAX, heads in Pallas).
# ---------------------------------------------------------------------------
def _linear_init(key, fan_in, fan_out):
    kw, kb = jax.random.split(key)
    bound = 1.0 / math.sqrt(fan_in)
    w = jax.random.uniform(kw, (fan_in, fan_out), jnp.float32, -bound, bound)
    b = jax.random.uniform(kb, (1, fan_out), jnp.float32, -bound, bound)
    return w, b


def init_head_params(key, input_dim, output_dim, num_heads):
    heads = []
    for k in jax.random.split(key, num_heads):
        k1, k2, k3 = jax.random.split(k, 3)
        w1, b1 = _linear_init(k1, input_dim, HIDDEN)
        w2, b2 = _linear_init(k2, HIDDEN, output_dim)
        wa, ba = _linear_init(k3, input_dim, output_dim)
        heads.append(dict(w1=w1, b1=b1, w2=w2, b2=b2, wa=wa, ba=ba))
    return heads


def init_hypernet_params(key, num_param_slots, total_params, num_heads):
    k1, k2, k3, k4, k5 = jax.random.split(key, 5)
    return dict(
        fe1=_linear_init(k1, 784, 128),
        fe2=_linear_init(k2, 128, 64),
        embeds=jax.random.normal(k3, (num_param_slots, 32), jnp.float32),
        heads=init_head_params(k4, 64 + 32, total_params, num_heads),
        gate=_linear_init(k5, 64, num_heads),
    )


def dynamic_selective_hypernet_forward(x, params, packed):
    batch = x.shape[0]
    xf = x.reshape(batch, -1)                                      # x.view(B, -1)

    (w1, b1), (w2, b2) = params["fe1"], params["fe2"]
    features = jnp.maximum(xf @ w1 + b1, 0.0) @ w2 + b2            # (B, 64)

    embeds = params["embeds"]                                      # (P, 32)
    num_slots = embeds.shape[0]
    rows = num_slots * batch
    cdt = packed["compute_dtype"]
    d_in_p = packed["d_in_p"]
    feat_dim, emb_dim = features.shape[1], embeds.shape[1]

    # Build the lane-padded bf16 head-input slab directly (no extra pad pass).
    head_inputs = jnp.zeros((rows, d_in_p), cdt)
    head_inputs = head_inputs.at[:, :feat_dim].set(
        jnp.broadcast_to(features[None].astype(cdt),
                         (num_slots, batch, feat_dim)).reshape(rows, feat_dim))
    head_inputs = head_inputs.at[:, feat_dim:feat_dim + emb_dim].set(
        jnp.broadcast_to(embeds[:, None, :].astype(cdt),
                         (num_slots, batch, emb_dim)).reshape(rows, emb_dim))

    wg, bg = params["gate"]
    head_importance = jax.nn.softmax(features @ wg + bg, axis=1)   # (B, H)

    num_heads = packed["num_heads"]
    total = packed["output_dim"]
    # TODO(synk): the reference module's broadcast of head_importance.unsqueeze(-1)
    # against (num_heads, B, T) is only defined for batch == num_heads; it is
    # reproduced literally here (gate factor for head h, batch b = gate[h, b]).
    if batch != num_heads:
        raise ValueError("reference combine requires batch == num_heads")
    gate_rows = jnp.tile(head_importance, (1, num_slots))          # (H, P*B)

    combined = selective_heads_combined(head_inputs, gate_rows, packed)  # (P*B, T)
    combined = combined.reshape(num_slots, batch, total)
    # torch.cat(final_weights, dim=1)  ->  (B, P*T)
    return jnp.transpose(combined, (1, 0, 2)).reshape(batch, num_slots * total)


# ---------------------------------------------------------------------------
if __name__ == "__main__":
    key = jax.random.PRNGKey(0)
    k_img, k_hyper, k_test, k_gate = jax.random.split(key, 4)

    num_heads = 4
    batch = 4                          # reference combine requires batch == num_heads
    # Tiny target net: Linear(6,8) + Linear(8,3) -> 4 parameter tensors.
    target_param_shapes = [(8, 6), (8,), (3, 8), (3,)]
    total_params = sum(math.prod(s) for s in target_param_shapes)   # 83
    num_param_slots = len(target_param_shapes)
    head_in_dim = 64 + 32                                           # 96

    params = init_hypernet_params(k_hyper, num_param_slots, total_params, num_heads)
    packed = pack_head_params(params["heads"], head_in_dim, total_params)

    # 1) Fused kernel (gen*imp, gate-weighted head reduction) vs pure-JAX reference.
    rows = num_param_slots * batch
    xin = jax.random.normal(k_test, (rows, head_in_dim), jnp.float32)
    gate = jax.nn.softmax(
        jax.random.normal(k_gate, (num_heads, rows), jnp.float32), axis=0)
    got = jax.block_until_ready(selective_heads_combined(xin, gate, packed))
    want = reference_combined(xin, params["heads"], gate)
    assert got.shape == (rows, total_params)
    assert bool(jnp.all(jnp.isfinite(got)))
    assert jnp.allclose(got, want, atol=1e-3, rtol=1e-3)

    # 2) Full DynamicSelectiveHyperNet forward with the kernel inside.
    x = jax.random.normal(k_img, (batch, 1, 28, 28), jnp.float32)
    out = jax.block_until_ready(dynamic_selective_hypernet_forward(x, params, packed))
    ref = reference_forward(x, params)
    assert out.shape == (batch, num_param_slots * total_params)
    assert bool(jnp.all(jnp.isfinite(out)))
    assert jnp.allclose(out, ref, atol=1e-3, rtol=1e-3)

    print("KERNEL_OK")
</pallas_src>

<mosaic_0001>
module attributes {stable_mosaic.version = 11 : i64} {
  func.func @_fused_heads_kernel(%arg0: i32, %arg1: i32, %arg2: i32, %arg3: memref<16x128xbf16, #tpu.memory_space<vmem>>, %arg4: memref<1x128x128xbf16, #tpu.memory_space<vmem>>, %arg5: memref<1x1x128xf32, #tpu.memory_space<vmem>>, %arg6: memref<1x128x128xbf16, #tpu.memory_space<vmem>>, %arg7: memref<1x1x128xf32, #tpu.memory_space<vmem>>, %arg8: memref<1x128x128xbf16, #tpu.memory_space<vmem>>, %arg9: memref<1x1x128xf32, #tpu.memory_space<vmem>>, %arg10: memref<1x16x1xf32, #tpu.memory_space<vmem>>, %arg11: memref<16x128xf32, #tpu.memory_space<vmem>>) attributes {dimension_semantics = [#tpu.dimension_semantics<parallel>, #tpu.dimension_semantics<parallel>, #tpu.dimension_semantics<arbitrary>], iteration_bounds = array<i64: 1, 1, 4>, scalar_prefetch = 0 : i64, scratch_operands = 0 : i64, tpu.core_type = #tpu.core_type<tc>, window_params = [{transform_indices = @transform_0, window_bounds = array<i64: 16, 128>}, {transform_indices = @transform_1, window_bounds = array<i64: 1, 128, 128>}, {transform_indices = @transform_2, window_bounds = array<i64: 1, 1, 128>}, {transform_indices = @transform_3, window_bounds = array<i64: 1, 128, 128>}, {transform_indices = @transform_4, window_bounds = array<i64: 1, 1, 128>}, {transform_indices = @transform_5, window_bounds = array<i64: 1, 128, 128>}, {transform_indices = @transform_6, window_bounds = array<i64: 1, 1, 128>}, {transform_indices = @transform_7, window_bounds = array<i64: 1, 16, 1>}, {transform_indices = @transform_8, window_bounds = array<i64: 16, 128>}]} {
    %c0_i32 = arith.constant 0 : i32
    %0 = arith.cmpi eq, %arg2, %c0_i32 : i32
    %1 = arith.extui %0 : i1 to i32
    %c0_i32_0 = arith.constant 0 : i32
    %2 = arith.cmpi ne, %1, %c0_i32_0 : i32
    scf.if %2 {
      %cst_31 = arith.constant 0.000000e+00 : f32
      %41 = vector.broadcast %cst_31 : f32 to vector<16x128xf32>
      %c0_32 = arith.constant 0 : index
      %c0_33 = arith.constant 0 : index
      %42 = vector.load %arg11[%c0_32, %c0_33] : memref<16x128xf32, #tpu.memory_space<vmem>>, vector<16x128xf32>
      tpu.vector_store %arg11[%c0_32, %c0_33], %41 {strides = array<i32>} : memref<16x128xf32, #tpu.memory_space<vmem>>, vector<16x128xf32>,
    } else {
    }
    %c0 = arith.constant 0 : index
    %c0_1 = arith.constant 0 : index
    %3 = vector.load %arg3[%c0, %c0_1] : memref<16x128xbf16, #tpu.memory_space<vmem>>, vector<16x128xbf16>
    %c0_2 = arith.constant 0 : index
    %c0_3 = arith.constant 0 : index
    %c0_4 = arith.constant 0 : index
    %4 = vector.load %arg4[%c0_2, %c0_3, %c0_4] : memref<1x128x128xbf16, #tpu.memory_space<vmem>>, vector<1x128x128xbf16>
    %5 = vector.shape_cast %4 : vector<1x128x128xbf16> to vector<128x128xbf16>
    %cst = arith.constant dense<0.000000e+00> : vector<16x128xf32>
    %6 = tpu.matmul %3, %5, %cst {dimension_numbers = #tpu.dot_dimension_numbers<[1], [0], [0], [1], [0, 0, 1, 1], [], []>} : vector<16x128xbf16>, vector<128x128xbf16>, vector<16x128xf32> -> vector<16x128xf32>
    %c0_5 = arith.constant 0 : index
    %c0_6 = arith.constant 0 : index
    %c0_7 = arith.constant 0 : index
    %7 = vector.load %arg5[%c0_5, %c0_6, %c0_7] : memref<1x1x128xf32, #tpu.memory_space<vmem>>, vector<1x1x128xf32>
    %8 = vector.shape_cast %7 : vector<1x1x128xf32> to vector<1x128xf32>
    %9 = vector.broadcast %8 : vector<1x128xf32> to vector<16x128xf32>
    %10 = arith.addf %6, %9 : vector<16x128xf32>
    %cst_8 = arith.constant 0.000000e+00 : f32
    %11 = vector.broadcast %cst_8 : f32 to vector<16x128xf32>
    %12 = arith.maximumf %10, %11 : vector<16x128xf32>
    %c0_9 = arith.constant 0 : index
    %c0_10 = arith.constant 0 : index
    %c0_11 = arith.constant 0 : index
    %13 = vector.load %arg6[%c0_9, %c0_10, %c0_11] : memref<1x128x128xbf16, #tpu.memory_space<vmem>>, vector<1x128x128xbf16>
    %14 = vector.shape_cast %13 : vector<1x128x128xbf16> to vector<128x128xbf16>
    %cst_12 = arith.constant dense<0.000000e+00> : vector<16x128xf32>
    %15 = tpu.matmul %3, %14, %cst_12 {dimension_numbers = #tpu.dot_dimension_numbers<[1], [0], [0], [1], [0, 0, 1, 1], [], []>} : vector<16x128xbf16>, vector<128x128xbf16>, vector<16x128xf32> -> vector<16x128xf32>
    %c0_13 = arith.constant 0 : index
    %c0_14 = arith.constant 0 : index
    %c0_15 = arith.constant 0 : index
    %16 = vector.load %arg7[%c0_13, %c0_14, %c0_15] : memref<1x1x128xf32, #tpu.memory_space<vmem>>, vector<1x1x128xf32>
    %17 = vector.shape_cast %16 : vector<1x1x128xf32> to vector<1x128xf32>
    %18 = vector.broadcast %17 : vector<1x128xf32> to vector<16x128xf32>
    %19 = arith.addf %15, %18 : vector<16x128xf32>
    %20 = arith.negf %19 : vector<16x128xf32>
    %21 = math.exp %20 : vector<16x128xf32>
    %cst_16 = arith.constant 1.000000e+00 : f32
    %22 = vector.broadcast %cst_16 : f32 to vector<16x128xf32>
    %23 = arith.addf %22, %21 : vector<16x128xf32>
    %24 = arith.divf %22, %23 : vector<16x128xf32>
    %25 = arith.truncf %12 : vector<16x128xf32> to vector<16x128xbf16>
    %c0_17 = arith.constant 0 : index
    %c0_18 = arith.constant 0 : index
    %c0_19 = arith.constant 0 : index
    %26 = vector.load %arg8[%c0_17, %c0_18, %c0_19] : memref<1x128x128xbf16, #tpu.memory_space<vmem>>, vector<1x128x128xbf16>
    %27 = vector.shape_cast %26 : vector<1x128x128xbf16> to vector<128x128xbf16>
    %cst_20 = arith.constant dense<0.000000e+00> : vector<16x128xf32>
    %28 = tpu.matmul %25, %27, %cst_20 {dimension_numbers = #tpu.dot_dimension_numbers<[1], [0], [0], [1], [0, 0, 1, 1], [], []>} : vector<16x128xbf16>, vector<128x128xbf16>, vector<16x128xf32> -> vector<16x128xf32>
    %c0_21 = arith.constant 0 : index
    %c0_22 = arith.constant 0 : index
    %c0_23 = arith.constant 0 : index
    %29 = vector.load %arg9[%c0_21, %c0_22, %c0_23] : memref<1x1x128xf32, #tpu.memory_space<vmem>>, vector<1x1x128xf32>
    %30 = vector.shape_cast %29 : vector<1x1x128xf32> to vector<1x128xf32>
    %31 = vector.broadcast %30 : vector<1x128xf32> to vector<16x128xf32>
    %32 = arith.addf %28, %31 : vector<16x128xf32>
    %c0_24 = arith.constant 0 : index
    %c0_25 = arith.constant 0 : index
    %33 = vector.load %arg11[%c0_24, %c0_25] : memref<16x128xf32, #tpu.memory_space<vmem>>, vector<16x128xf32>
    %34 = arith.mulf %32, %24 : vector<16x128xf32>
    %c0_26 = arith.constant 0 : index
    %c0_27 = arith.constant 0 : index
    %c0_28 = arith.constant 0 : index
    %35 = vector.load %arg10[%c0_26, %c0_27, %c0_28] : memref<1x16x1xf32, #tpu.memory_space<vmem>>, vector<1x16x1xf32>
    %36 = vector.shape_cast %35 : vector<1x16x1xf32> to vector<16x1xf32>
    %37 = vector.broadcast %36 : vector<16x1xf32> to vector<16x128xf32>
    %38 = arith.mulf %34, %37 : vector<16x128xf32>
    %39 = arith.addf %33, %38 : vector<16x128xf32>
    %c0_29 = arith.constant 0 : index
    %c0_30 = arith.constant 0 : index
    %40 = vector.load %arg11[%c0_29, %c0_30] : memref<16x128xf32, #tpu.memory_space<vmem>>, vector<16x128xf32>
    tpu.vector_store %arg11[%c0_29, %c0_30], %39 {strides = array<i32>} : memref<16x128xf32, #tpu.memory_space<vmem>>, vector<16x128xf32>,
    return
  }
  func.func @transform_0(%arg0: i32, %arg1: i32, %arg2: i32) -> (i32, i32) {
    %c0_i32 = arith.constant 0 : i32
    %c0_i32_0 = arith.constant 0 : i32
    return %arg0, %c0_i32 : i32, i32
  }
  func.func @transform_1(%arg0: i32, %arg1: i32, %arg2: i32) -> (i32, i32, i32) {
    %c0_i32 = arith.constant 0 : i32
    %c0_i32_0 = arith.constant 0 : i32
    %c0_i32_1 = arith.constant 0 : i32
    return %arg2, %c0_i32, %c0_i32_0 : i32, i32, i32
  }
  func.func @transform_2(%arg0: i32, %arg1: i32, %arg2: i32) -> (i32, i32, i32) {
    %c0_i32 = arith.constant 0 : i32
    %c0_i32_0 = arith.constant 0 : i32
    %c0_i32_1 = arith.constant 0 : i32
    return %arg2, %c0_i32, %c0_i32_0 : i32, i32, i32
  }
  func.func @transform_3(%arg0: i32, %arg1: i32, %arg2: i32) -> (i32, i32, i32) {
    %c0_i32 = arith.constant 0 : i32
    %c0_i32_0 = arith.constant 0 : i32
    return %arg2, %c0_i32, %arg1 : i32, i32, i32
  }
  func.func @transform_4(%arg0: i32, %arg1: i32, %arg2: i32) -> (i32, i32, i32) {
    %c0_i32 = arith.constant 0 : i32
    %c0_i32_0 = arith.constant 0 : i32
    return %arg2, %c0_i32, %arg1 : i32, i32, i32
  }
  func.func @transform_5(%arg0: i32, %arg1: i32, %arg2: i32) -> (i32, i32, i32) {
    %c0_i32 = arith.constant 0 : i32
    %c0_i32_0 = arith.constant 0 : i32
    return %arg2, %c0_i32, %arg1 : i32, i32, i32
  }
  func.func @transform_6(%arg0: i32, %arg1: i32, %arg2: i32) -> (i32, i32, i32) {
    %c0_i32 = arith.constant 0 : i32
    %c0_i32_0 = arith.constant 0 : i32
    return %arg2, %c0_i32, %arg1 : i32, i32, i32
  }
  func.func @transform_7(%arg0: i32, %arg1: i32, %arg2: i32) -> (i32, i32, i32) {
    %c0_i32 = arith.constant 0 : i32
    %c0_i32_0 = arith.constant 0 : i32
    return %arg2, %arg0, %c0_i32 : i32, i32, i32
  }
  func.func @transform_8(%arg0: i32, %arg1: i32, %arg2: i32) -> (i32, i32) {
    %c0_i32 = arith.constant 0 : i32
    return %arg0, %arg1 : i32, i32
  }
}

</mosaic_0001>

<llo_original>
// kernel: tpu_custom_call.1
$region0: #{tpu_custom_call.1}
  #allocation0 [shape = 'u32[]', space=smem, size = 0x4, offset = 0x4, fixed_abs, tag = 'smem constant byte address 0x4 - core index']
  #allocation1 [shape = 'u32[144,128]{1,0:T(1,128)}', space=vmem, size = 0x12000, scoped, tag = 'internal scratch']
  %s0 = inlined_call_operand.vmem [shape: bf16[16,128], index: 0, kind: input, shape index: {}]
  %s1 = inlined_call_operand.hbm [shape: bf16[4,128,128], index: 1, kind: input, shape index: {}]
  %s2 = inlined_call_operand.vmem [shape: f32[4,1,128], index: 2, kind: input, shape index: {}]
  %s3 = inlined_call_operand.hbm [shape: bf16[4,128,128], index: 3, kind: input, shape index: {}]
  %s4 = inlined_call_operand.vmem [shape: f32[4,1,128], index: 4, kind: input, shape index: {}]
  %s5 = inlined_call_operand.hbm [shape: bf16[4,128,128], index: 5, kind: input, shape index: {}]
  %s6 = inlined_call_operand.vmem [shape: f32[4,1,128], index: 6, kind: input, shape index: {}]
  %s7 = inlined_call_operand.vmem [shape: f32[4,16,1], index: 7, kind: input, shape index: {}]
  %s8 = inlined_call_operand.hbm [shape: f32[16,128], index: 8, kind: output, shape index: {}]
  %s9 = sld [smem:[#allocation0]]
  $region81: #{tpu_custom_call.1} parent=0
    _
  %s11 = ssub.s32 1, %s9
  %s12 = scalar_select 0, %s11, %s9
  $region1: #{tpu_custom_call.1} parent=0
    #allocation2 [shape = 'u8[65536]{0}', space=vmem, size = 0x10000, scoped, tag = 'input window, operand 1']
    #allocation3 [shape = 's32[2]{0}', space=sflag, size = 0x8, scoped, tag = 'scoped memory for tpu_custom_call.1']
    #allocation4 [shape = 's32[2]{0}', space=sflag, size = 0x8, scoped, tag = 'scoped memory for tpu_custom_call.1']
    #allocation5 [shape = 'u8[65536]{0}', space=vmem, size = 0x10000, scoped, tag = 'input window, operand 3']
    #allocation6 [shape = 's32[2]{0}', space=sflag, size = 0x8, scoped, tag = 'scoped memory for tpu_custom_call.1']
    #allocation7 [shape = 'u8[65536]{0}', space=vmem, size = 0x10000, scoped, tag = 'input window, operand 5']
    #allocation8 [shape = 'u8[8192]{0}', space=vmem, size = 0x2000, scoped, tag = 'output window, operand 0, single buffered']
    %13 = vsyncpa [#allocation3], 0
    %s14 = scalar_lea.sflag [#allocation3], 1
    %15 = vsyncpa %s14, 0
    %16 = vsyncpa [#allocation6], 0
    %s17 = scalar_lea.sflag [#allocation6], 1
    %18 = vsyncpa %s17, 0
    %19 = vsyncpa [#allocation4], 0
    loop: start=0, step=1, limit=6
    $region2: #{tpu_custom_call.1} parent=1 // loop_pre_header
      _
    $region3: #{tpu_custom_call.1} parent=1 // loop_header
      %s21 = sphi 0, %s25
      %p22 = scmp.ge.s32.totalorder %s21, 6
      %s28 = sphi 0, %s47
      %s29 = sphi 0, %s43
      %s30 = sphi 0, %s39
      %s31 = sphi 0, %s28
      %s32 = sphi 0, %s29
      %s33 = sphi 0, %s30
      %s34 = sphi 0, %s31
      %s35 = sphi 0, %s32
      %s36 = sphi 0, %s33
      %s50 = sphi 0, %s52
      %s53 = sphi 0, %s50
      %s54 = sphi 0, %s53
      %s70 = sphi 0, %s54
      %s76 = sphi 0, %s78
      %s79 = sphi 0, %s76
      %s80 = sphi 0, %s79
      %s96 = sphi 0, %s80
      %s102 = sphi 0, %s104
      %s105 = sphi 0, %s102
      %s106 = sphi 0, %s105
      %s122 = sphi 0, %s106
      %s130 = sphi 0, %s132
      %s133 = sphi 0, %s130
      %s134 = sphi 0, %s133
      %s150 = sphi 0, %s134
      %s158 = sphi 0, %s160
      %s161 = sphi 0, %s158
      %s162 = sphi 0, %s161
      %s178 = sphi 0, %s162
      %s186 = sphi 0, %s188
      %s189 = sphi 0, %s186
      %s190 = sphi 0, %s189
      %s206 = sphi 0, %s190
      %s214 = sphi 0, %s216
      %s217 = sphi 0, %s214
      %s218 = sphi 0, %s217
      %s234 = sphi 0, %s218
      %s242 = sphi 0, %s244
      %s245 = sphi 0, %s242
      %s246 = sphi 0, %s245
      %s262 = sphi 0, %s246
      %s270 = sphi 0, %s272
      %s273 = sphi 0, %s270
      %s274 = sphi 0, %s273
      %s290 = sphi 0, %s274
    $region4: #{tpu_custom_call.1} parent=1 // loop_header_branch
      %24 = sbr.rel (%p22) target = $region8
    $region5: #{tpu_custom_call.1} parent=1 // loop_body
      %s26 = ssub.s32 %s21, 1
      %s27 = ssub.s32 %s21, 2
      %s37 = sadd.s32 1, %s30
      %p38 = scmp.ge.s32.totalorder %s37, 4
      %s39 = scalar_select %p38, 0, %s37
      %s40 = sadd.s32 1, %s29
      %s41 = scalar_select %p38, %s40, %s29
      %p42 = scmp.ge.s32.totalorder %s41, 1
      %s43 = scalar_select %p42, 0, %s41
      %s44 = sadd.s32 1, %s28
      %s45 = scalar_select %p42, %s44, %s28
      %p46 = scmp.ge.s32.totalorder %s45, 1
      %s47 = scalar_select %p46, 0, %s45
      %s48 = ssub.s32 %s28, %s47
      %p49 = scmp.eq.s32.totalorder %s48, 0
      %s51 = sadd.s32 %s50, 1
      %s52 = scalar_select %p49, %s50, %s51
      %p55 = pneg %p49
      %p56 = scmp.eq.s32.totalorder %s21, 3
      %p57 = por %p55, %p56
      %p58 = scmp.ne.s32.totalorder %s50, %s53
      %p59 = scmp.eq.s32.totalorder %s21, 0
      %p60 = por %p58, %p59
      %p61 = scmp.ne.s32.totalorder %s50, %s53
      %p62 = scmp.eq.s32.totalorder %s26, 3
      %p63 = por %p61, %p62
      %p64 = scmp.ne.s32.totalorder %s53, %s54
      %p65 = scmp.eq.s32.totalorder %s26, 0
      %p66 = por %p64, %p65
      %p67 = scmp.ne.s32.totalorder %s53, %s54
      %p68 = scmp.eq.s32.totalorder %s27, 3
      %p69 = por %p67, %p68
      %p71 = scmp.ne.s32.totalorder %s54, %s70
      %p72 = scmp.eq.s32.totalorder %s27, 0
      %p73 = por %p71, %p72
      %s74 = ssub.s32 %s30, %s39
      %p75 = scmp.eq.s32.totalorder %s74, 0
      %s77 = sadd.s32 %s76, 1
      %s78 = scalar_select %p75, %s76, %s77
      %p81 = pneg %p75
      %p82 = scmp.eq.s32.totalorder %s21, 3
      %p83 = por %p81, %p82
      %p84 = scmp.ne.s32.totalorder %s76, %s79
      %p85 = scmp.eq.s32.totalorder %s21, 0
      %p86 = por %p84, %p85
      %p87 = scmp.ne.s32.totalorder %s76, %s79
      %p88 = scmp.eq.s32.totalorder %s26, 3
      %p89 = por %p87, %p88
      %p90 = scmp.ne.s32.totalorder %s79, %s80
      %p91 = scmp.eq.s32.totalorder %s26, 0
      %p92 = por %p90, %p91
      %p93 = scmp.ne.s32.totalorder %s79, %s80
      %p94 = scmp.eq.s32.totalorder %s27, 3
      %p95 = por %p93, %p94
      %p97 = scmp.ne.s32.totalorder %s80, %s96
      %p98 = scmp.eq.s32.totalorder %s27, 0
      %p99 = por %p97, %p98
      %s100 = ssub.s32 %s30, %s39
      %p101 = scmp.eq.s32.totalorder %s100, 0
      %s103 = sadd.s32 %s102, 1
      %s104 = scalar_select %p101, %s102, %s103
      %p107 = pneg %p101
      %p108 = scmp.eq.s32.totalorder %s21, 3
      %p109 = por %p107, %p108
      %p110 = scmp.ne.s32.totalorder %s102, %s105
      %p111 = scmp.eq.s32.totalorder %s21, 0
      %p112 = por %p110, %p111
      %p113 = scmp.ne.s32.totalorder %s102, %s105
      %p114 = scmp.eq.s32.totalorder %s26, 3
      %p115 = por %p113, %p114
      %p116 = scmp.ne.s32.totalorder %s105, %s106
      %p117 = scmp.eq.s32.totalorder %s26, 0
      %p118 = por %p116, %p117
      %p119 = scmp.ne.s32.totalorder %s105, %s106
      %p120 = scmp.eq.s32.totalorder %s27, 3
      %p121 = por %p119, %p120
      %p123 = scmp.ne.s32.totalorder %s106, %s122
      %p124 = scmp.eq.s32.totalorder %s27, 0
      %p125 = por %p123, %p124
      %s126 = ssub.s32 %s30, %s39
      %s127 = ssub.s32 %s29, %s43
      %s128 = sor.u32 %s126, %s127
      %p129 = scmp.eq.s32.totalorder %s128, 0
      %s131 = sadd.s32 %s130, 1
      %s132 = scalar_select %p129, %s130, %s131
      %p135 = pneg %p129
      %p136 = scmp.eq.s32.totalorder %s21, 3
      %p137 = por %p135, %p136
      %p138 = scmp.ne.s32.totalorder %s130, %s133
      %p139 = scmp.eq.s32.totalorder %s21, 0
      %p140 = por %p138, %p139
      %p141 = scmp.ne.s32.totalorder %s130, %s133
      %p142 = scmp.eq.s32.totalorder %s26, 3
      %p143 = por %p141, %p142
      %p144 = scmp.ne.s32.totalorder %s133, %s134
      %p145 = scmp.eq.s32.totalorder %s26, 0
      %p146 = por %p144, %p145
      %p147 = scmp.ne.s32.totalorder %s133, %s134
      %p148 = scmp.eq.s32.totalorder %s27, 3
      %p149 = por %p147, %p148
      %p151 = scmp.ne.s32.totalorder %s134, %s150
      %p152 = scmp.eq.s32.totalorder %s27, 0
      %p153 = por %p151, %p152
      %s154 = ssub.s32 %s30, %s39
      %s155 = ssub.s32 %s29, %s43
      %s156 = sor.u32 %s154, %s155
      %p157 = scmp.eq.s32.totalorder %s156, 0
      %s159 = sadd.s32 %s158, 1
      %s160 = scalar_select %p157, %s158, %s159
      %p163 = pneg %p157
      %p164 = scmp.eq.s32.totalorder %s21, 3
      %p165 = por %p163, %p164
      %p166 = scmp.ne.s32.totalorder %s158, %s161
      %p167 = scmp.eq.s32.totalorder %s21, 0
      %p168 = por %p166, %p167
      %p169 = scmp.ne.s32.totalorder %s158, %s161
      %p170 = scmp.eq.s32.totalorder %s26, 3
      %p171 = por %p169, %p170
      %p172 = scmp.ne.s32.totalorder %s161, %s162
      %p173 = scmp.eq.s32.totalorder %s26, 0
      %p174 = por %p172, %p173
      %p175 = scmp.ne.s32.totalorder %s161, %s162
      %p176 = scmp.eq.s32.totalorder %s27, 3
      %p177 = por %p175, %p176
      %p179 = scmp.ne.s32.totalorder %s162, %s178
      %p180 = scmp.eq.s32.totalorder %s27, 0
      %p181 = por %p179, %p180
      %s182 = ssub.s32 %s30, %s39
      %s183 = ssub.s32 %s29, %s43
      %s184 = sor.u32 %s182, %s183
      %p185 = scmp.eq.s32.totalorder %s184, 0
      %s187 = sadd.s32 %s186, 1
      %s188 = scalar_select %p185, %s186, %s187
      %p191 = pneg %p185
      %p192 = scmp.eq.s32.totalorder %s21, 3
      %p193 = por %p191, %p192
      %p194 = scmp.ne.s32.totalorder %s186, %s189
      %p195 = scmp.eq.s32.totalorder %s21, 0
      %p196 = por %p194, %p195
      %p197 = scmp.ne.s32.totalorder %s186, %s189
      %p198 = scmp.eq.s32.totalorder %s26, 3
      %p199 = por %p197, %p198
      %p200 = scmp.ne.s32.totalorder %s189, %s190
      %p201 = scmp.eq.s32.totalorder %s26, 0
      %p202 = por %p200, %p201
      %p203 = scmp.ne.s32.totalorder %s189, %s190
      %p204 = scmp.eq.s32.totalorder %s27, 3
      %p205 = por %p203, %p204
      %p207 = scmp.ne.s32.totalorder %s190, %s206
      %p208 = scmp.eq.s32.totalorder %s27, 0
      %p209 = por %p207, %p208
      %s210 = ssub.s32 %s30, %s39
      %s211 = ssub.s32 %s29, %s43
      %s212 = sor.u32 %s210, %s211
      %p213 = scmp.eq.s32.totalorder %s212, 0
      %s215 = sadd.s32 %s214, 1
      %s216 = scalar_select %p213, %s214, %s215
      %p219 = pneg %p213
      %p220 = scmp.eq.s32.totalorder %s21, 3
      %p221 = por %p219, %p220
      %p222 = scmp.ne.s32.totalorder %s214, %s217
      %p223 = scmp.eq.s32.totalorder %s21, 0
      %p224 = por %p222, %p223
      %p225 = scmp.ne.s32.totalorder %s214, %s217
      %p226 = scmp.eq.s32.totalorder %s26, 3
      %p227 = por %p225, %p226
      %p228 = scmp.ne.s32.totalorder %s217, %s218
      %p229 = scmp.eq.s32.totalorder %s26, 0
      %p230 = por %p228, %p229
      %p231 = scmp.ne.s32.totalorder %s217, %s218
      %p232 = scmp.eq.s32.totalorder %s27, 3
      %p233 = por %p231, %p232
      %p235 = scmp.ne.s32.totalorder %s218, %s234
      %p236 = scmp.eq.s32.totalorder %s27, 0
      %p237 = por %p235, %p236
      %s238 = ssub.s32 %s30, %s39
      %s239 = ssub.s32 %s28, %s47
      %s240 = sor.u32 %s238, %s239
      %p241 = scmp.eq.s32.totalorder %s240, 0
      %s243 = sadd.s32 %s242, 1
      %s244 = scalar_select %p241, %s242, %s243
      %p247 = pneg %p241
      %p248 = scmp.eq.s32.totalorder %s21, 3
      %p249 = por %p247, %p248
      %p250 = scmp.ne.s32.totalorder %s242, %s245
      %p251 = scmp.eq.s32.totalorder %s21, 0
      %p252 = por %p250, %p251
      %p253 = scmp.ne.s32.totalorder %s242, %s245
      %p254 = scmp.eq.s32.totalorder %s26, 3
      %p255 = por %p253, %p254
      %p256 = scmp.ne.s32.totalorder %s245, %s246
      %p257 = scmp.eq.s32.totalorder %s26, 0
      %p258 = por %p256, %p257
      %p259 = scmp.ne.s32.totalorder %s245, %s246
      %p260 = scmp.eq.s32.totalorder %s27, 3
      %p261 = por %p259, %p260
      %p263 = scmp.ne.s32.totalorder %s246, %s262
      %p264 = scmp.eq.s32.totalorder %s27, 0
      %p265 = por %p263, %p264
      %s266 = ssub.s32 %s28, %s47
      %s267 = ssub.s32 %s29, %s43
      %s268 = sor.u32 %s266, %s267
      %p269 = scmp.eq.s32.totalorder %s268, 0
      %s271 = sadd.s32 %s270, 1
      %s272 = scalar_select %p269, %s270, %s271
      %p275 = pneg %p269
      %p276 = scmp.eq.s32.totalorder %s21, 3
      %p277 = por %p275, %p276
      %p278 = scmp.ne.s32.totalorder %s270, %s273
      %p279 = scmp.eq.s32.totalorder %s21, 0
      %p280 = por %p278, %p279
      %p281 = scmp.ne.s32.totalorder %s270, %s273
      %p282 = scmp.eq.s32.totalorder %s26, 3
      %p283 = por %p281, %p282
      %p284 = scmp.ne.s32.totalorder %s273, %s274
      %p285 = scmp.eq.s32.totalorder %s26, 0
      %p286 = por %p284, %p285
      %p287 = scmp.ne.s32.totalorder %s273, %s274
      %p288 = scmp.eq.s32.totalorder %s27, 3
      %p289 = por %p287, %p288
      %p291 = scmp.ne.s32.totalorder %s274, %s290
      %p292 = scmp.eq.s32.totalorder %s27, 0
      %p293 = por %p291, %p292
      %p294 = scmp.le.s32.totalorder 1, %s21
      %p295 = scmp.lt.s32.totalorder %s21, 5
      %p296 = pnand %p294, %p295
      %p297 = pneg %p296
      // Predicated region
      $region9: #{tpu_custom_call.1} parent=5 // pred_check
        _
      $region10: #{tpu_custom_call.1} parent=5 // pred_check_branch
        %299 = sbr.rel (%p296) target = $region12
      $region11: #{tpu_custom_call.1} parent=5 // pred_region
        %s300 = ssub.s32 %s21, 1
        // Predicated region
        $region13: #{tpu_custom_call.1} parent=11 // pred_check
          %p301 = pneg %p66
        $region14: #{tpu_custom_call.1} parent=11 // pred_check_branch
          %303 = sbr.rel (%p301) target = $region16
        $region15: #{tpu_custom_call.1} parent=11 // pred_region
          %s304 = smul.u32 2, %s31
          %p305 = scmp.lt.s32.totalorder %s304, 1
          %s306 = scalar_select %p305, %s304, 1
          %s307 = smul.addr %s306, 4
          %s308 = scalar_lea.vmem %s0, %s307
          %s309 = smul.u32 2, %s31
        $region16: #{tpu_custom_call.1} parent=11 // pred_fallthru
          _
      $region12: #{tpu_custom_call.1} parent=5 // pred_fallthru
        _
      %p310 = scmp.lt.s32.totalorder %s21, 4
      // Predicated region
      $region17: #{tpu_custom_call.1} parent=5 // pred_check
        %p311 = pneg %p310
      $region18: #{tpu_custom_call.1} parent=5 // pred_check_branch
        %313 = sbr.rel (%p311) target = $region20
      $region19: #{tpu_custom_call.1} parent=5 // pred_region
        // Predicated region
        $region21: #{tpu_custom_call.1} parent=19 // pred_check
          %p314 = pneg %p86
        $region22: #{tpu_custom_call.1} parent=19 // pred_check_branch
          %316 = sbr.rel (%p314) target = $region24
        $region23: #{tpu_custom_call.1} parent=19 // pred_region
          %s317 = sand.u32 %s76, 1
          %s318 = scalar_lea.sflag [#allocation3], %s317
          %s319 = sand.u32 %s76, 1
          %s320 = smul.addr %s319, 64
          %s321 = scalar_lea.vmem [#allocation2], %s320
          %s323 = ssub.s32 1024, 1024
          %324 = vsyncadd %s318, %s323
          %s325 = smul.addr %s30, 16
          %s326 = smul.addr %s325, 64
          %s327 = scalar_lea.hbm %s1, %s326
          %s328 = sshll.u32 %s321, 4
          %s329 = int_to_ptr.vmem [resolvable:$true] %s328
          %334 = dma.hbm_to_vmem [thread:$0]  %s327, 1024, %s329, %s318, 64, 64, 4
        $region24: #{tpu_custom_call.1} parent=19 // pred_fallthru
          _
        // Predicated region
        $region25: #{tpu_custom_call.1} parent=19 // pred_check
          %p335 = pneg %p112
        $region26: #{tpu_custom_call.1} parent=19 // pred_check_branch
          %337 = sbr.rel (%p335) target = $region28
        $region27: #{tpu_custom_call.1} parent=19 // pred_region
          %p338 = scmp.lt.s32.totalorder %s30, 3
          %s339 = scalar_select %p338, %s30, 3
          %s340 = scalar_lea.vmem %s2, %s339
        $region28: #{tpu_custom_call.1} parent=19 // pred_fallthru
          _
        // Predicated region
        $region29: #{tpu_custom_call.1} parent=19 // pred_check
          %p341 = pneg %p140
        $region30: #{tpu_custom_call.1} parent=19 // pred_check_branch
          %343 = sbr.rel (%p341) target = $region32
        $region31: #{tpu_custom_call.1} parent=19 // pred_region
          %s344 = sand.u32 %s21, 1
          %s345 = scalar_lea.sflag [#allocation6], %s344
          %s346 = sand.u32 %s130, 1
          %s347 = smul.addr %s346, 64
          %s348 = scalar_lea.vmem [#allocation5], %s347
          %s350 = ssub.s32 1024, 1024
          %351 = vsyncadd %s345, %s350
          %s352 = smul.addr %s30, 16
          %s353 = sadd.s32 %s29, %s352
          %s354 = smul.addr %s353, 64
          %s355 = scalar_lea.hbm %s3, %s354
          %s356 = sshll.u32 %s348, 4
          %s357 = int_to_ptr.vmem [resolvable:$true] %s356
          %362 = dma.hbm_to_vmem [thread:$0]  %s355, 1024, %s357, %s345, 64, 64, 4
        $region32: #{tpu_custom_call.1} parent=19 // pred_fallthru
          _
        // Predicated region
        $region33: #{tpu_custom_call.1} parent=19 // pred_check
          %p363 = pneg %p168
        $region34: #{tpu_custom_call.1} parent=19 // pred_check_branch
          %365 = sbr.rel (%p363) target = $region36
        $region35: #{tpu_custom_call.1} parent=19 // pred_region
          %p366 = scmp.lt.s32.totalorder %s30, 3
          %s367 = scalar_select %p366, %s30, 3
          %p368 = scmp.lt.s32.totalorder %s29, 0
          %s369 = scalar_select %p368, %s29, 0
          %s370 = sadd.s32 %s369, %s367
          %s371 = scalar_lea.vmem %s4, %s370
        $region36: #{tpu_custom_call.1} parent=19 // pred_fallthru
          _
        // Predicated region
        $region37: #{tpu_custom_call.1} parent=19 // pred_check
          %p372 = pneg %p196
        $region38: #{tpu_custom_call.1} parent=19 // pred_check_branch
          %374 = sbr.rel (%p372) target = $region40
        $region39: #{tpu_custom_call.1} parent=19 // pred_region
          %s375 = sand.u32 %s21, 1
          %s376 = scalar_lea.sflag [#allocation6], %s375
          %s377 = sand.u32 %s186, 1
          %s378 = smul.addr %s377, 64
          %s379 = scalar_lea.vmem [#allocation7], %s378
          %s381 = ssub.s32 1024, 1024
          %382 = vsyncadd %s376, %s381
          %s383 = smul.addr %s30, 16
          %s384 = sadd.s32 %s29, %s383
          %s385 = smul.addr %s384, 64
          %s386 = scalar_lea.hbm %s5, %s385
          %s387 = sshll.u32 %s379, 4
          %s388 = int_to_ptr.vmem [resolvable:$true] %s387
          %393 = dma.hbm_to_vmem [thread:$0]  %s386, 1024, %s388, %s376, 64, 64, 4
        $region40: #{tpu_custom_call.1} parent=19 // pred_fallthru
          _
        // Predicated region
        $region41: #{tpu_custom_call.1} parent=19 // pred_check
          %p394 = pneg %p224
        $region42: #{tpu_custom_call.1} parent=19 // pred_check_branch
          %396 = sbr.rel (%p394) target = $region44
        $region43: #{tpu_custom_call.1} parent=19 // pred_region
          %p397 = scmp.lt.s32.totalorder %s30, 3
          %s398 = scalar_select %p397, %s30, 3
          %p399 = scmp.lt.s32.totalorder %s29, 0
          %s400 = scalar_select %p399, %s29, 0
          %s401 = sadd.s32 %s400, %s398
          %s402 = scalar_lea.vmem %s6, %s401
        $region44: #{tpu_custom_call.1} parent=19 // pred_fallthru
          _
        // Predicated region
        $region45: #{tpu_custom_call.1} parent=19 // pred_check
          %p403 = pneg %p252
        $region46: #{tpu_custom_call.1} parent=19 // pred_check_branch
          %405 = sbr.rel (%p403) target = $region48
        $region47: #{tpu_custom_call.1} parent=19 // pred_region
          %s406 = smul.u32 2, %s28
          %p407 = scmp.lt.s32.totalorder %s30, 3
          %s408 = scalar_select %p407, %s30, 3
          %p409 = scmp.lt.s32.totalorder %s406, 1
          %s410 = scalar_select %p409, %s406, 1
          %s411 = smul.addr %s408, 2
          %s412 = sadd.s32 %s410, %s411
          %s413 = smul.addr %s412, 8
          %s414 = scalar_lea.vmem %s7, %s413
          %s415 = smul.u32 2, %s28
        $region48: #{tpu_custom_call.1} parent=19 // pred_fallthru
          _
      $region20: #{tpu_custom_call.1} parent=5 // pred_fallthru
        _
      %p416 = scmp.le.s32.totalorder 1, %s21
      %p417 = scmp.lt.s32.totalorder %s21, 5
      %p418 = pnand %p416, %p417
      %p419 = pneg %p418
      // Predicated region
      $region49: #{tpu_custom_call.1} parent=5 // pred_check
        _
      $region50: #{tpu_custom_call.1} parent=5 // pred_check_branch
        %421 = sbr.rel (%p418) target = $region52
      $region51: #{tpu_custom_call.1} parent=5 // pred_region
        %s422 = ssub.s32 %s21, 1
        %s423 = sand.u32 %s79, 1
        %s424 = scalar_lea.sflag [#allocation3], %s423
        %s425 = sand.u32 %s79, 1
        %s426 = smul.addr %s425, 64
        %s427 = scalar_lea.vmem [#allocation2], %s426
        // Predicated region
        $region53: #{tpu_custom_call.1} parent=51 // pred_check
          %p428 = pneg %p92
        $region54: #{tpu_custom_call.1} parent=51 // pred_check_branch
          %430 = sbr.rel (%p428) target = $region56
        $region55: #{tpu_custom_call.1} parent=51 // pred_region
          %431 = dma.done %s424, 1024
        $region56: #{tpu_custom_call.1} parent=51 // pred_fallthru
          _
        %s432 = sand.u32 %s26, 1
        %s433 = scalar_lea.sflag [#allocation6], %s432
        %s434 = sand.u32 %s133, 1
        %s435 = smul.addr %s434, 64
        %s436 = scalar_lea.vmem [#allocation5], %s435
        // Predicated region
        $region57: #{tpu_custom_call.1} parent=51 // pred_check
          %p437 = pneg %p146
        $region58: #{tpu_custom_call.1} parent=51 // pred_check_branch
          %439 = sbr.rel (%p437) target = $region60
        $region59: #{tpu_custom_call.1} parent=51 // pred_region
          %440 = dma.done %s433, 1024
        $region60: #{tpu_custom_call.1} parent=51 // pred_fallthru
          _
        %s441 = sand.u32 %s26, 1
        %s442 = scalar_lea.sflag [#allocation6], %s441
        %s443 = sand.u32 %s189, 1
        %s444 = smul.addr %s443, 64
        %s445 = scalar_lea.vmem [#allocation7], %s444
        // Predicated region
        $region61: #{tpu_custom_call.1} parent=51 // pred_check
          %p446 = pneg %p202
        $region62: #{tpu_custom_call.1} parent=51 // pred_check_branch
          %448 = sbr.rel (%p446) target = $region64
        $region63: #{tpu_custom_call.1} parent=51 // pred_region
          %449 = dma.done %s442, 1024
        $region64: #{tpu_custom_call.1} parent=51 // pred_fallthru
          _
        %s450 = smul.u32 2, %s31
        %p451 = scmp.lt.s32.totalorder %s450, 1
        %s452 = scalar_select %p451, %s450, 1
        %s453 = smul.addr %s452, 4
        %s454 = scalar_lea.vmem %s0, %s453
        %p455 = pneg %p66
        %p456 = pneg %p63
        %s457 = sand.u32 %s79, 1
        %s458 = scalar_lea.sflag [#allocation3], %s457
        %s459 = sand.u32 %s79, 1
        %s460 = smul.addr %s459, 64
        %s461 = scalar_lea.vmem [#allocation2], %s460
        %p462 = pneg %p92
        %p463 = pneg %p89
        %p464 = scmp.lt.s32.totalorder %s33, 3
        %s465 = scalar_select %p464, %s33, 3
        %s466 = scalar_lea.vmem %s2, %s465
        %p467 = pneg %p118
        %p468 = pneg %p115
        %s469 = sand.u32 %s26, 1
        %s470 = scalar_lea.sflag [#allocation6], %s469
        %s471 = sand.u32 %s133, 1
        %s472 = smul.addr %s471, 64
        %s473 = scalar_lea.vmem [#allocation5], %s472
        %p474 = pneg %p146
        %p475 = pneg %p143
        %p476 = scmp.lt.s32.totalorder %s33, 3
        %s477 = scalar_select %p476, %s33, 3
        %p478 = scmp.lt.s32.totalorder %s32, 0
        %s479 = scalar_select %p478, %s32, 0
        %s480 = sadd.s32 %s479, %s477
        %s481 = scalar_lea.vmem %s4, %s480
        %p482 = pneg %p174
        %p483 = pneg %p171
        %s484 = sand.u32 %s26, 1
        %s485 = scalar_lea.sflag [#allocation6], %s484
        %s486 = sand.u32 %s189, 1
        %s487 = smul.addr %s486, 64
        %s488 = scalar_lea.vmem [#allocation7], %s487
        %p489 = pneg %p202
        %p490 = pneg %p199
        %p491 = scmp.lt.s32.totalorder %s33, 3
        %s492 = scalar_select %p491, %s33, 3
        %p493 = scmp.lt.s32.totalorder %s32, 0
        %s494 = scalar_select %p493, %s32, 0
        %s495 = sadd.s32 %s494, %s492
        %s496 = scalar_lea.vmem %s6, %s495
        %p497 = pneg %p230
        %p498 = pneg %p227
        %s499 = smul.u32 2, %s31
        %p500 = scmp.lt.s32.totalorder %s33, 3
        %s501 = scalar_select %p500, %s33, 3
        %p502 = scmp.lt.s32.totalorder %s499, 1
        %s503 = scalar_select %p502, %s499, 1
        %s504 = smul.addr %s501, 2
        %s505 = sadd.s32 %s503, %s504
        %s506 = smul.addr %s505, 8
        %s507 = scalar_lea.vmem %s7, %s506
        %p508 = pneg %p258
        %p509 = pneg %p255
        %p510 = pneg %p286
        %p511 = pneg %p283
        %s512 = smul.u32 2, %s31
        %p513 = scmp.lt.s32.totalorder %s512, 1
        %s514 = scalar_select %p513, %s512, 1
        %s515 = smul.addr %s514, 4
        %s516 = scalar_lea.vmem %s0, %s515
        %s517 = smul.u32 2, %s31
        %p518 = scmp.lt.s32.totalorder %s33, 3
        %s519 = scalar_select %p518, %s33, 3
        %s520 = scalar_lea.vmem %s2, %s519
        %p521 = scmp.lt.s32.totalorder %s33, 3
        %s522 = scalar_select %p521, %s33, 3
        %p523 = scmp.lt.s32.totalorder %s32, 0
        %s524 = scalar_select %p523, %s32, 0
        %s525 = sadd.s32 %s524, %s522
        %s526 = scalar_lea.vmem %s4, %s525
        %p527 = scmp.lt.s32.totalorder %s33, 3
        %s528 = scalar_select %p527, %s33, 3
        %p529 = scmp.lt.s32.totalorder %s32, 0
        %s530 = scalar_select %p529, %s32, 0
        %s531 = sadd.s32 %s530, %s528
        %s532 = scalar_lea.vmem %s6, %s531
        %s533 = smul.u32 2, %s31
        %p534 = scmp.lt.s32.totalorder %s33, 3
        %s535 = scalar_select %p534, %s33, 3
        %p536 = scmp.lt.s32.totalorder %s533, 1
        %s537 = scalar_select %p536, %s533, 1
        %s538 = smul.addr %s535, 2
        %s539 = sadd.s32 %s537, %s538
        %s540 = smul.addr %s539, 8
        %s541 = scalar_lea.vmem %s7, %s540
        %s542 = smul.u32 2, %s31
        %s543 = smul.u32 2, %s31
        %p545 = scmp.eq.s32.totalorder %s33, 0
        // Predicated region
        $region65: #{tpu_custom_call.1} parent=51 // pred_check
          %p546 = pneg %p545
        $region66: #{tpu_custom_call.1} parent=51 // pred_check_branch
          %548 = sbr.rel (%p546) target = $region68
        $region67: #{tpu_custom_call.1} parent=51 // pred_region
          %549 = vst [vmem:[#allocation8] sm:$0xff] 0.0
          %550 = vst [vmem:[#allocation8 + $0x8] sm:$0xff] 0.0
        $region68: #{tpu_custom_call.1} parent=51 // pred_fallthru
          _
        %v551 = vld [vmem:[%s516] sm:$0xf]
        %v552 = vld [vmem:[%s516 + $0x4] sm:$0xf]
        %v553 = vld [vmem:[%s427] sm:$0xf]
        %v554 = vld [vmem:[%s427 + $0x4] sm:$0xf]
        %v555 = vld [vmem:[%s427 + $0x8] sm:$0xf]
        %v556 = vld [vmem:[%s427 + $0xc] sm:$0xf]
        %v557 = vld [vmem:[%s427 + $0x10] sm:$0xf]
        %v558 = vld [vmem:[%s427 + $0x14] sm:$0xf]
        %v559 = vld [vmem:[%s427 + $0x18] sm:$0xf]
        %v560 = vld [vmem:[%s427 + $0x1c] sm:$0xf]
        %v561 = vld [vmem:[%s427 + $0x20] sm:$0xf]
        %v562 = vld [vmem:[%s427 + $0x24] sm:$0xf]
        %v563 = vld [vmem:[%s427 + $0x28] sm:$0xf]
        %v564 = vld [vmem:[%s427 + $0x2c] sm:$0xf]
        %v565 = vld [vmem:[%s427 + $0x30] sm:$0xf]
        %v566 = vld [vmem:[%s427 + $0x34] sm:$0xf]
        %v567 = vld [vmem:[%s427 + $0x38] sm:$0xf]
        %v568 = vld [vmem:[%s427 + $0x3c] sm:$0xf]
        %v569 = vld [vmem:[%s520] sm:$0x1]
        %v571 = vlaneseq
        %v572 = vshrl.u32 %v571, 7
        %v573 = vsub.s32 0, %v572
        %v574 = vrot.slane %v569, %v573
        %v578 = vunpack.c.l.b16 %v551
        %v579 = vunpack.c.l.b16 %v552
        %v580 = vpack.c.b16 %v579, %v578
        %v598 = vunpack.c.l.b16 %v553
        %v599 = vunpack.c.l.b16 %v554
        %v600 = vunpack.c.l.b16 %v555
        %v601 = vunpack.c.l.b16 %v556
        %v602 = vunpack.c.l.b16 %v557
        %v603 = vunpack.c.l.b16 %v558
        %v604 = vunpack.c.l.b16 %v559
        %v605 = vunpack.c.l.b16 %v560
        %v606 = vunpack.c.l.b16 %v561
        %v607 = vunpack.c.l.b16 %v562
        %v608 = vunpack.c.l.b16 %v563
        %v609 = vunpack.c.l.b16 %v564
        %v610 = vunpack.c.l.b16 %v565
        %v611 = vunpack.c.l.b16 %v566
        %v612 = vunpack.c.l.b16 %v567
        %v613 = vunpack.c.l.b16 %v568
        %v614 = vpack.c.b16 %v599, %v598
        %v615 = vpack.c.b16 %v601, %v600
        %v616 = vpack.c.b16 %v603, %v602
        %v617 = vpack.c.b16 %v605, %v604
        %v618 = vpack.c.b16 %v607, %v606
        %v619 = vpack.c.b16 %v609, %v608
        %v620 = vpack.c.b16 %v611, %v610
        %v621 = vpack.c.b16 %v613, %v612
        %630 = vmatprep.subr.bf16.mxu0 0
        %631 = vmatpush1.bf16.msra.mxu0 %v614
        %632 = vmatprep.subr.bf16.mxu0 0
        %633 = vmatpush1.bf16.msra.mxu0 %v615
        %634 = vmatprep.subr.bf16.mxu0 0
        %635 = vmatpush1.bf16.msra.mxu0 %v616
        %636 = vmatprep.subr.bf16.mxu0 0
        %637 = vmatpush1.bf16.msra.mxu0 %v617
        %638 = vmatprep.subr.bf16.mxu0 0
        %639 = vmatpush1.bf16.msra.mxu0 %v618
        %640 = vmatprep.subr.bf16.mxu0 0
        %641 = vmatpush1.bf16.msra.mxu0 %v619
        %642 = vmatprep.subr.bf16.mxu0 0
        %643 = vmatpush1.bf16.msra.mxu0 %v620
        %644 = vmatprep.subr.bf16.mxu0 0
        %645 = vmatpush1.bf16.msra.mxu0 %v621
        %646 = vmatprep.subr.bf16.mxu0 0
        %647 = vmatpush1.bf16.msra.mxu0 0
        %648 = vmatprep.subr.bf16.mxu0 0
        %649 = vmatpush1.bf16.msra.mxu0 0
        %650 = vmatprep.subr.bf16.mxu0 0
        %651 = vmatpush1.bf16.msra.mxu0 0
        %652 = vmatprep.subr.bf16.mxu0 0
        %653 = vmatpush1.bf16.msra.mxu0 0
        %654 = vmatprep.subr.bf16.mxu0 0
        %655 = vmatpush1.bf16.msra.mxu0 0
        %656 = vmatprep.subr.bf16.mxu0 0
        %657 = vmatpush1.bf16.msra.mxu0 0
        %658 = vmatprep.subr.bf16.mxu0 0
        %659 = vmatpush1.bf16.msra.mxu0 0
        %660 = vmatprep.subr.bf16.mxu0 0
        %661 = vmatpush1.bf16.msra.mxu0 0
        %662 = vmatprep.mubr.bf16.mxu0 0
        %663 = vmatmul.mubr.bf16.gmra.mrb[0].mxu0 %v580
        %v664 = vpop.f32.mrb[0].mxu0
        %v665 = vadd.f32 %v574, %v664
        %v666 = vpop.f32.mrb[0].mxu0
        %v667 = vpop.f32.mrb[0].mxu0
        %v668 = vadd.f32 %v574, %v667
        %v669 = vpop.f32.mrb[0].mxu0
        %670 = vdwg.mxu0
        %v671 = vmax.f32 %v665, 0.0
        %v672 = vmax.f32 %v668, 0.0
        %v673 = vld [vmem:[%s436] sm:$0xf]
        %v674 = vld [vmem:[%s436 + $0x4] sm:$0xf]
        %v675 = vld [vmem:[%s436 + $0x8] sm:$0xf]
        %v676 = vld [vmem:[%s436 + $0xc] sm:$0xf]
        %v677 = vld [vmem:[%s436 + $0x10] sm:$0xf]
        %v678 = vld [vmem:[%s436 + $0x14] sm:$0xf]
        %v679 = vld [vmem:[%s436 + $0x18] sm:$0xf]
        %v680 = vld [vmem:[%s436 + $0x1c] sm:$0xf]
        %v681 = vld [vmem:[%s436 + $0x20] sm:$0xf]
        %v682 = vld [vmem:[%s436 + $0x24] sm:$0xf]
        %v683 = vld [vmem:[%s436 + $0x28] sm:$0xf]
        %v684 = vld [vmem:[%s436 + $0x2c] sm:$0xf]
        %v685 = vld [vmem:[%s436 + $0x30] sm:$0xf]
        %v686 = vld [vmem:[%s436 + $0x34] sm:$0xf]
        %v687 = vld [vmem:[%s436 + $0x38] sm:$0xf]
        %v688 = vld [vmem:[%s436 + $0x3c] sm:$0xf]
        %v689 = vld [vmem:[%s526] sm:$0x1]
        %v691 = vlaneseq
        %v692 = vshrl.u32 %v691, 7
        %v693 = vsub.s32 0, %v692
        %v694 = vrot.slane %v689, %v693
        %v712 = vunpack.c.l.b16 %v673
        %v713 = vunpack.c.l.b16 %v674
        %v714 = vunpack.c.l.b16 %v675
        %v715 = vunpack.c.l.b16 %v676
        %v716 = vunpack.c.l.b16 %v677
        %v717 = vunpack.c.l.b16 %v678
        %v718 = vunpack.c.l.b16 %v679
        %v719 = vunpack.c.l.b16 %v680
        %v720 = vunpack.c.l.b16 %v681
        %v721 = vunpack.c.l.b16 %v682
        %v722 = vunpack.c.l.b16 %v683
        %v723 = vunpack.c.l.b16 %v684
        %v724 = vunpack.c.l.b16 %v685
        %v725 = vunpack.c.l.b16 %v686
        %v726 = vunpack.c.l.b16 %v687
        %v727 = vunpack.c.l.b16 %v688
        %v728 = vpack.c.b16 %v713, %v712
        %v729 = vpack.c.b16 %v715, %v714
        %v730 = vpack.c.b16 %v717, %v716
        %v731 = vpack.c.b16 %v719, %v718
        %v732 = vpack.c.b16 %v721, %v720
        %v733 = vpack.c.b16 %v723, %v722
        %v734 = vpack.c.b16 %v725, %v724
        %v735 = vpack.c.b16 %v727, %v726
        %744 = vmatprep.subr.bf16.mxu0 0
        %745 = vmatpush1.bf16.msra.mxu0 %v728
        %746 = vmatprep.subr.bf16.mxu0 0
        %747 = vmatpush1.bf16.msra.mxu0 %v729
        %748 = vmatprep.subr.bf16.mxu0 0
        %749 = vmatpush1.bf16.msra.mxu0 %v730
        %750 = vmatprep.subr.bf16.mxu0 0
        %751 = vmatpush1.bf16.msra.mxu0 %v731
        %752 = vmatprep.subr.bf16.mxu0 0
        %753 = vmatpush1.bf16.msra.mxu0 %v732
        %754 = vmatprep.subr.bf16.mxu0 0
        %755 = vmatpush1.bf16.msra.mxu0 %v733
        %756 = vmatprep.subr.bf16.mxu0 0
        %757 = vmatpush1.bf16.msra.mxu0 %v734
        %758 = vmatprep.subr.bf16.mxu0 0
        %759 = vmatpush1.bf16.msra.mxu0 %v735
        %760 = vmatprep.subr.bf16.mxu0 0
        %761 = vmatpush1.bf16.msra.mxu0 0
        %762 = vmatprep.subr.bf16.mxu0 0
        %763 = vmatpush1.bf16.msra.mxu0 0
        %764 = vmatprep.subr.bf16.mxu0 0
        %765 = vmatpush1.bf16.msra.mxu0 0
        %766 = vmatprep.subr.bf16.mxu0 0
        %767 = vmatpush1.bf16.msra.mxu0 0
        %768 = vmatprep.subr.bf16.mxu0 0
        %769 = vmatpush1.bf16.msra.mxu0 0
        %770 = vmatprep.subr.bf16.mxu0 0
        %771 = vmatpush1.bf16.msra.mxu0 0
        %772 = vmatprep.subr.bf16.mxu0 0
        %773 = vmatpush1.bf16.msra.mxu0 0
        %774 = vmatprep.subr.bf16.mxu0 0
        %775 = vmatpush1.bf16.msra.mxu0 0
        %776 = vmatprep.mubr.bf16.mxu0 0
        %777 = vmatmul.mubr.bf16.gmra.mrb[0].mxu0 %v580
        %v778 = vpop.f32.mrb[0].mxu0
        %v779 = vadd.f32 %v694, %v778
        %v780 = vpop.f32.mrb[0].mxu0
        %v781 = vpop.f32.mrb[0].mxu0
        %v782 = vadd.f32 %v694, %v781
        %v783 = vpop.f32.mrb[0].mxu0
        %784 = vdwg.mxu0
        %v785 = vxor.u32 %v779, 2147483648
        %v786 = vxor.u32 %v782, 2147483648
        %v787 = vmul.f32 %v785, 1.442695
        %v788 = vpow.pop %v787
        %v789 = vmul.f32 %v786, 1.442695
        %v790 = vpow.pop %v789
        %v791 = vadd.f32 %v788, 1.0
        %v792 = vadd.f32 %v790, 1.0
        %v793 = vrcp.pop %v791
        %v794 = vmul.f32 1.0, %v793
        %v795 = vrcp.pop %v792
        %v796 = vmul.f32 1.0, %v795
        %v797 = vpack.c.bf16 %v672, %v671
        %v798 = vld [vmem:[%s445] sm:$0xf]
        %v799 = vld [vmem:[%s445 + $0x4] sm:$0xf]
        %v800 = vld [vmem:[%s445 + $0x8] sm:$0xf]
        %v801 = vld [vmem:[%s445 + $0xc] sm:$0xf]
        %v802 = vld [vmem:[%s445 + $0x10] sm:$0xf]
        %v803 = vld [vmem:[%s445 + $0x14] sm:$0xf]
        %v804 = vld [vmem:[%s445 + $0x18] sm:$0xf]
        %v805 = vld [vmem:[%s445 + $0x1c] sm:$0xf]
        %v806 = vld [vmem:[%s445 + $0x20] sm:$0xf]
        %v807 = vld [vmem:[%s445 + $0x24] sm:$0xf]
        %v808 = vld [vmem:[%s445 + $0x28] sm:$0xf]
        %v809 = vld [vmem:[%s445 + $0x2c] sm:$0xf]
        %v810 = vld [vmem:[%s445 + $0x30] sm:$0xf]
        %v811 = vld [vmem:[%s445 + $0x34] sm:$0xf]
        %v812 = vld [vmem:[%s445 + $0x38] sm:$0xf]
        %v813 = vld [vmem:[%s445 + $0x3c] sm:$0xf]
        %v814 = vld [vmem:[%s532] sm:$0x1]
        %v816 = vlaneseq
        %v817 = vshrl.u32 %v816, 7
        %v818 = vsub.s32 0, %v817
        %v819 = vrot.slane %v814, %v818
        %v837 = vunpack.c.l.b16 %v798
        %v838 = vunpack.c.l.b16 %v799
        %v839 = vunpack.c.l.b16 %v800
        %v840 = vunpack.c.l.b16 %v801
        %v841 = vunpack.c.l.b16 %v802
        %v842 = vunpack.c.l.b16 %v803
        %v843 = vunpack.c.l.b16 %v804
        %v844 = vunpack.c.l.b16 %v805
        %v845 = vunpack.c.l.b16 %v806
        %v846 = vunpack.c.l.b16 %v807
        %v847 = vunpack.c.l.b16 %v808
        %v848 = vunpack.c.l.b16 %v809
        %v849 = vunpack.c.l.b16 %v810
        %v850 = vunpack.c.l.b16 %v811
        %v851 = vunpack.c.l.b16 %v812
        %v852 = vunpack.c.l.b16 %v813
        %v853 = vpack.c.b16 %v838, %v837
        %v854 = vpack.c.b16 %v840, %v839
        %v855 = vpack.c.b16 %v842, %v841
        %v856 = vpack.c.b16 %v844, %v843
        %v857 = vpack.c.b16 %v846, %v845
        %v858 = vpack.c.b16 %v848, %v847
        %v859 = vpack.c.b16 %v850, %v849
        %v860 = vpack.c.b16 %v852, %v851
        %869 = vmatprep.subr.bf16.mxu0 0
        %870 = vmatpush1.bf16.msra.mxu0 %v853
        %871 = vmatprep.subr.bf16.mxu0 0
        %872 = vmatpush1.bf16.msra.mxu0 %v854
        %873 = vmatprep.subr.bf16.mxu0 0
        %874 = vmatpush1.bf16.msra.mxu0 %v855
        %875 = vmatprep.subr.bf16.mxu0 0
        %876 = vmatpush1.bf16.msra.mxu0 %v856
        %877 = vmatprep.subr.bf16.mxu0 0
        %878 = vmatpush1.bf16.msra.mxu0 %v857
        %879 = vmatprep.subr.bf16.mxu0 0
        %880 = vmatpush1.bf16.msra.mxu0 %v858
        %881 = vmatprep.subr.bf16.mxu0 0
        %882 = vmatpush1.bf16.msra.mxu0 %v859
        %883 = vmatprep.subr.bf16.mxu0 0
        %884 = vmatpush1.bf16.msra.mxu0 %v860
        %885 = vmatprep.subr.bf16.mxu0 0
        %886 = vmatpush1.bf16.msra.mxu0 0
        %887 = vmatprep.subr.bf16.mxu0 0
        %888 = vmatpush1.bf16.msra.mxu0 0
        %889 = vmatprep.subr.bf16.mxu0 0
        %890 = vmatpush1.bf16.msra.mxu0 0
        %891 = vmatprep.subr.bf16.mxu0 0
        %892 = vmatpush1.bf16.msra.mxu0 0
        %893 = vmatprep.subr.bf16.mxu0 0
        %894 = vmatpush1.bf16.msra.mxu0 0
        %895 = vmatprep.subr.bf16.mxu0 0
        %896 = vmatpush1.bf16.msra.mxu0 0
        %897 = vmatprep.subr.bf16.mxu0 0
        %898 = vmatpush1.bf16.msra.mxu0 0
        %899 = vmatprep.subr.bf16.mxu0 0
        %900 = vmatpush1.bf16.msra.mxu0 0
        %901 = vmatprep.mubr.bf16.mxu0 0
        %902 = vmatmul.mubr.bf16.gmra.mrb[0].mxu0 %v797
        %v903 = vpop.f32.mrb[0].mxu0
        %v904 = vadd.f32 %v819, %v903
        %v905 = vpop.f32.mrb[0].mxu0
        %v906 = vpop.f32.mrb[0].mxu0
        %v907 = vadd.f32 %v819, %v906
        %v908 = vpop.f32.mrb[0].mxu0
        %909 = vdwg.mxu0
        %v910 = vld [vmem:[#allocation8] sm:$0xff]
        %v911 = vld [vmem:[#allocation8 + $0x8] sm:$0xff]
        %v912 = vmul.f32 %v904, %v794
        %v913 = vmul.f32 %v907, %v796
        %v914 = vld [vmem:[%s541] sm:$0xff]
        %v915 = vld [vmem:[%s541 + $0x8] sm:$0xff]
        %917 = vset.pattern.permute.xlu0 0
        %918 = vperm.xlu0 %917, %v914
        %v919 = vpop.permute.xlu0 %918
        %922 = vset.pattern.permute.xlu0 0
        %923 = vperm.xlu0 %922, %v915
        %v924 = vpop.permute.xlu0 %923
        %v926 = vmul.f32 %v912, %v919
        %v927 = vmul.f32 %v913, %v924
        %v928 = vadd.f32 %v910, %v926
        %v929 = vadd.f32 %v911, %v927
        %930 = vst [vmem:[#allocation8] sm:$0xff] %v928
        %931 = vst [vmem:[#allocation8 + $0x8] sm:$0xff] %v929
        // Predicated region
        $region69: #{tpu_custom_call.1} parent=51 // pred_check
          %p932 = pneg %p283
        $region70: #{tpu_custom_call.1} parent=51 // pred_check_branch
          %934 = sbr.rel (%p932) target = $region72
        $region71: #{tpu_custom_call.1} parent=51 // pred_region
          %s935 = smul.u32 2, %s31
          %s937 = ssub.s32 256, 256
          %938 = vsyncadd [#allocation4], %s937
          %s939 = sadd.s32 %s32, %s935
          %s940 = smul.addr %s939, 128
          %s941 = scalar_lea.hbm %s8, %s940
          %s942 = sshll.u32 [#allocation8], 4
          %s943 = int_to_ptr.vmem [resolvable:$true] %s942
          %948 = dma.vmem_to_hbm [thread:$0]  %s943, 256, %s941, [#allocation4], 128, 128, 8
        $region72: #{tpu_custom_call.1} parent=51 // pred_fallthru
          _
        // Predicated region
        $region73: #{tpu_custom_call.1} parent=51 // pred_check
          %p949 = pneg %p283
        $region74: #{tpu_custom_call.1} parent=51 // pred_check_branch
          %951 = sbr.rel (%p949) target = $region76
        $region75: #{tpu_custom_call.1} parent=51 // pred_region
          %952 = dma.done [#allocation4], 256
        $region76: #{tpu_custom_call.1} parent=51 // pred_fallthru
          _
      $region52: #{tpu_custom_call.1} parent=5 // pred_fallthru
        _
      %p953 = scmp.le.s32.totalorder 2, %s21
      // Predicated region
      $region77: #{tpu_custom_call.1} parent=5 // pred_check
        %p954 = pneg %p953
      $region78: #{tpu_custom_call.1} parent=5 // pred_check_branch
        %956 = sbr.rel (%p954) target = $region80
      $region79: #{tpu_custom_call.1} parent=5 // pred_region
        %s957 = ssub.s32 %s21, 2
      $region80: #{tpu_custom_call.1} parent=5 // pred_fallthru
        _
    $region6: #{tpu_custom_call.1} parent=1 // loop_footer
      %s25 = sadd.s32 1, %s21
    $region7: #{tpu_custom_call.1} parent=1 // loop_footer_branch
      %20 = sbr.rel target = $region3
    $region8: #{tpu_custom_call.1} parent=1 // loop_exit
      _
    %958 = vsyncpa [#allocation3], 1
    %s959 = scalar_lea.sflag [#allocation3], 1
    %960 = vsyncpa %s959, 1
    %961 = vsyncpa [#allocation6], 1
    %s962 = scalar_lea.sflag [#allocation6], 1
    %963 = vsyncpa %s962, 1
    %964 = vsyncpa [#allocation4], 1
    %s965 = scalar_lea.sflag [#allocation4], 1
    %966 = vsyncpa %s965, 1

</llo_original>
